<compile_context>
chip_gen: v7x
topology: tpu7x:2x2x1
jax: 0.10.0
libtpu: 0.0.40
codegen_flags: <defaults>
</compile_context>

<pallas_src>
import jax
import jax.numpy as jnp
from jax.experimental import pallas as pl
from jax.experimental.pallas import tpu as pltpu


def _kan_be_kernel(x_ref, w1_ref, b1_ref, w2_ref, b2_ref, out_ref):
    """One (TB, D) batch tile of the shared-weight ensemble forward.

    mean_k over K identical shared-weight members == a single forward pass,
    so no K expansion / reduction appears here (exact equivalence).
    """
    # Linear 1: bf16 inputs, f32 accumulation on the MXU.
    h = jnp.dot(x_ref[...], w1_ref[...], preferred_element_type=jnp.float32)
    h = h + b1_ref[...]                         # (TB, H) f32
    h = h * jax.nn.sigmoid(h)                   # SiLU in f32 (EUP slot)
    # Linear 2: cast activation back to bf16 for the MXU, accumulate in f32.
    y = jnp.dot(h.astype(w2_ref.dtype), w2_ref[...],
                preferred_element_type=jnp.float32)
    out_ref[...] = (y + b2_ref[...]).astype(out_ref.dtype)


def _round_up(n, m):
    return (n + m - 1) // m * m


def kan_batch_ensemble_forward(x, w1, b1, w2, b2, *, k, tb=128):
    """Forward of KANBatchEnsembleWrapper around a shared-weight MLP.

    `k` is part of the module interface but is algebraically eliminated:
    with shared weights, the mean over k identical ensemble members equals a
    single forward pass (bit-for-bit at the level of the math performed).
    """
    del k  # eliminated: mean over identical shared-weight members == f(x)
    B, D = x.shape
    H = w1.shape[1]
    O = w2.shape[1]

    # Lane-dense padding (multiples of 128) + batch padded to the tile size.
    Bp = _round_up(B, tb)
    Dp = _round_up(D, 128)
    Hp = _round_up(H, 128)
    Op = _round_up(O, 128)

    xp = jnp.zeros((Bp, Dp), jnp.bfloat16).at[:B, :D].set(x.astype(jnp.bfloat16))
    w1p = jnp.zeros((Dp, Hp), jnp.bfloat16).at[:D, :H].set(w1.astype(jnp.bfloat16))
    b1p = jnp.zeros((1, Hp), jnp.float32).at[:, :H].set(b1.astype(jnp.float32))
    w2p = jnp.zeros((Hp, Op), jnp.bfloat16).at[:H, :O].set(w2.astype(jnp.bfloat16))
    b2p = jnp.zeros((1, Op), jnp.float32).at[:, :O].set(b2.astype(jnp.float32))

    out = pl.pallas_call(
        _kan_be_kernel,
        out_shape=jax.ShapeDtypeStruct((Bp, Op), jnp.float32),
        grid_spec=pltpu.PrefetchScalarGridSpec(
            num_scalar_prefetch=0,
            grid=(Bp // tb,),
            in_specs=[
                pl.BlockSpec((tb, Dp), lambda i: (i, 0)),   # x: batch-tiled
                pl.BlockSpec((Dp, Hp), lambda i: (0, 0)),   # w1: VMEM-resident
                pl.BlockSpec((1, Hp), lambda i: (0, 0)),    # b1
                pl.BlockSpec((Hp, Op), lambda i: (0, 0)),   # w2
                pl.BlockSpec((1, Op), lambda i: (0, 0)),    # b2
            ],
            out_specs=pl.BlockSpec((tb, Op), lambda i: (i, 0)),
        ),
        compiler_params=pltpu.CompilerParams(
            dimension_semantics=("parallel",)),   # megacore split on v7x
    )(xp, w1p, b1p, w2p, b2p)

    return out[:B, :O]


def reference_forward(x, w1, b1, w2, b2, *, k):
    """Faithful module semantics (expand -> model -> mean), same bf16 casts."""
    B, D = x.shape
    xb = x.astype(jnp.bfloat16)
    x_flat = jnp.broadcast_to(xb[:, None, :], (B, k, D)).reshape(B * k, D)
    h = jnp.dot(x_flat, w1.astype(jnp.bfloat16),
                preferred_element_type=jnp.float32) + b1
    h = h * jax.nn.sigmoid(h)
    y_flat = jnp.dot(h.astype(jnp.bfloat16), w2.astype(jnp.bfloat16),
                     preferred_element_type=jnp.float32) + b2
    y = y_flat.reshape(B, k, -1)
    return y.mean(axis=1)


if __name__ == "__main__":
    # Lane-dense, MXU-friendly demo shapes (D/H/O multiples of 128).
    B, K, D, H, O = 256, 4, 256, 256, 128

    key = jax.random.PRNGKey(0)
    kx, kw1, kb1, kw2, kb2 = jax.random.split(key, 5)

    x = jax.random.normal(kx, (B, D), dtype=jnp.float32)
    w1 = jax.random.normal(kw1, (D, H), dtype=jnp.float32) * 0.1
    b1 = jax.random.normal(kb1, (1, H), dtype=jnp.float32) * 0.1
    w2 = jax.random.normal(kw2, (H, O), dtype=jnp.float32) * 0.1
    b2 = jax.random.normal(kb2, (1, O), dtype=jnp.float32) * 0.1

    y = kan_batch_ensemble_forward(x, w1, b1, w2, b2, k=K, tb=128)
    y = jax.block_until_ready(y)

    y_ref = reference_forward(x, w1, b1, w2, b2, k=K)
    assert y.shape == (B, O)
    assert jnp.allclose(y, y_ref, atol=1e-2, rtol=1e-2), "mismatch vs reference"

    print("KERNEL_OK")
</pallas_src>

<mosaic_0001>
module attributes {stable_mosaic.version = 11 : i64} {
  func.func @_kan_be_kernel(%arg0: i32, %arg1: memref<128x256xbf16, #tpu.memory_space<vmem>>, %arg2: memref<256x256xbf16, #tpu.memory_space<vmem>>, %arg3: memref<1x256xf32, #tpu.memory_space<vmem>>, %arg4: memref<256x128xbf16, #tpu.memory_space<vmem>>, %arg5: memref<1x128xf32, #tpu.memory_space<vmem>>, %arg6: memref<128x128xf32, #tpu.memory_space<vmem>>) attributes {dimension_semantics = [#tpu.dimension_semantics<parallel>], iteration_bounds = array<i64: 2>, scalar_prefetch = 0 : i64, scratch_operands = 0 : i64, tpu.core_type = #tpu.core_type<tc>, window_params = [{transform_indices = @transform_0, window_bounds = array<i64: 128, 256>}, {pipeline_mode = #tpu.pipeline_mode<synchronous>, transform_indices = @transform_1, window_bounds = array<i64: 256, 256>}, {pipeline_mode = #tpu.pipeline_mode<synchronous>, transform_indices = @transform_2, window_bounds = array<i64: 1, 256>}, {pipeline_mode = #tpu.pipeline_mode<synchronous>, transform_indices = @transform_3, window_bounds = array<i64: 256, 128>}, {pipeline_mode = #tpu.pipeline_mode<synchronous>, transform_indices = @transform_4, window_bounds = array<i64: 1, 128>}, {transform_indices = @transform_5, window_bounds = array<i64: 128, 128>}]} {
    %c0 = arith.constant 0 : index
    %c0_0 = arith.constant 0 : index
    %0 = vector.load %arg1[%c0, %c0_0] : memref<128x256xbf16, #tpu.memory_space<vmem>>, vector<128x256xbf16>
    %c0_1 = arith.constant 0 : index
    %c0_2 = arith.constant 0 : index
    %1 = vector.load %arg2[%c0_1, %c0_2] : memref<256x256xbf16, #tpu.memory_space<vmem>>, vector<256x256xbf16>
    %cst = arith.constant dense<0.000000e+00> : vector<128x256xf32>
    %2 = tpu.matmul %0, %1, %cst {dimension_numbers = #tpu.dot_dimension_numbers<[1], [0], [0], [1], [0, 0, 1, 1], [], []>} : vector<128x256xbf16>, vector<256x256xbf16>, vector<128x256xf32> -> vector<128x256xf32>
    %c0_3 = arith.constant 0 : index
    %c0_4 = arith.constant 0 : index
    %3 = vector.load %arg3[%c0_3, %c0_4] : memref<1x256xf32, #tpu.memory_space<vmem>>, vector<1x256xf32>
    %4 = vector.broadcast %3 : vector<1x256xf32> to vector<128x256xf32>
    %5 = arith.addf %2, %4 : vector<128x256xf32>
    %6 = arith.negf %5 : vector<128x256xf32>
    %7 = math.exp %6 : vector<128x256xf32>
    %cst_5 = arith.constant 1.000000e+00 : f32
    %8 = vector.broadcast %cst_5 : f32 to vector<128x256xf32>
    %9 = arith.addf %8, %7 : vector<128x256xf32>
    %10 = arith.divf %8, %9 : vector<128x256xf32>
    %11 = arith.mulf %5, %10 : vector<128x256xf32>
    %12 = arith.truncf %11 : vector<128x256xf32> to vector<128x256xbf16>
    %c0_6 = arith.constant 0 : index
    %c0_7 = arith.constant 0 : index
    %13 = vector.load %arg4[%c0_6, %c0_7] : memref<256x128xbf16, #tpu.memory_space<vmem>>, vector<256x128xbf16>
    %cst_8 = arith.constant dense<0.000000e+00> : vector<128x128xf32>
    %14 = tpu.matmul %12, %13, %cst_8 {dimension_numbers = #tpu.dot_dimension_numbers<[1], [0], [0], [1], [0, 0, 1, 1], [], []>} : vector<128x256xbf16>, vector<256x128xbf16>, vector<128x128xf32> -> vector<128x128xf32>
    %c0_9 = arith.constant 0 : index
    %c0_10 = arith.constant 0 : index
    %15 = vector.load %arg5[%c0_9, %c0_10] : memref<1x128xf32, #tpu.memory_space<vmem>>, vector<1x128xf32>
    %16 = vector.broadcast %15 : vector<1x128xf32> to vector<128x128xf32>
    %17 = arith.addf %14, %16 : vector<128x128xf32>
    %c0_11 = arith.constant 0 : index
    %c0_12 = arith.constant 0 : index
    %18 = vector.load %arg6[%c0_11, %c0_12] : memref<128x128xf32, #tpu.memory_space<vmem>>, vector<128x128xf32>
    tpu.vector_store %arg6[%c0_11, %c0_12], %17 {strides = array<i32>} : memref<128x128xf32, #tpu.memory_space<vmem>>, vector<128x128xf32>,
    return
  }
  func.func @transform_0(%arg0: i32) -> (i32, i32) {
    %c0_i32 = arith.constant 0 : i32
    %c0_i32_0 = arith.constant 0 : i32
    return %arg0, %c0_i32 : i32, i32
  }
  func.func @transform_1(%arg0: i32) -> (i32, i32) {
    %c0_i32 = arith.constant 0 : i32
    %c0_i32_0 = arith.constant 0 : i32
    %c0_i32_1 = arith.constant 0 : i32
    return %c0_i32, %c0_i32_0 : i32, i32
  }
  func.func @transform_2(%arg0: i32) -> (i32, i32) {
    %c0_i32 = arith.constant 0 : i32
    %c0_i32_0 = arith.constant 0 : i32
    %c0_i32_1 = arith.constant 0 : i32
    return %c0_i32, %c0_i32_0 : i32, i32
  }
  func.func @transform_3(%arg0: i32) -> (i32, i32) {
    %c0_i32 = arith.constant 0 : i32
    %c0_i32_0 = arith.constant 0 : i32
    %c0_i32_1 = arith.constant 0 : i32
    return %c0_i32, %c0_i32_0 : i32, i32
  }
  func.func @transform_4(%arg0: i32) -> (i32, i32) {
    %c0_i32 = arith.constant 0 : i32
    %c0_i32_0 = arith.constant 0 : i32
    %c0_i32_1 = arith.constant 0 : i32
    return %c0_i32, %c0_i32_0 : i32, i32
  }
  func.func @transform_5(%arg0: i32) -> (i32, i32) {
    %c0_i32 = arith.constant 0 : i32
    %c0_i32_0 = arith.constant 0 : i32
    return %arg0, %c0_i32 : i32, i32
  }
}

</mosaic_0001>

<llo_original>
// kernel: tpu_custom_call.1
$region0: #{tpu_custom_call.1}
  #allocation0 [shape = 'u32[]', space=smem, size = 0x4, offset = 0x4, fixed_abs, tag = 'smem constant byte address 0x4 - core index']
  #allocation1 [shape = 'u32[144,128]{1,0:T(1,128)}', space=vmem, size = 0x12000, scoped, tag = 'internal scratch']
  %s0 = inlined_call_operand.hbm [shape: bf16[256,256], index: 0, kind: input, shape index: {}]
  %s1 = inlined_call_operand.hbm [shape: bf16[256,256], index: 1, kind: input, shape index: {}]
  %s2 = inlined_call_operand.vmem [shape: f32[1,256], index: 2, kind: input, shape index: {}]
  %s3 = inlined_call_operand.hbm [shape: bf16[256,128], index: 3, kind: input, shape index: {}]
  %s4 = inlined_call_operand.vmem [shape: f32[1,128], index: 4, kind: input, shape index: {}]
  %s5 = inlined_call_operand.hbm [shape: f32[256,128], index: 5, kind: output, shape index: {}]
  %s6 = sld [smem:[#allocation0]]
  $region65: #{tpu_custom_call.1} parent=0
    _
  %s8 = ssub.s32 1, %s6
  %s9 = scalar_select 0, %s8, %s6
  $region1: #{tpu_custom_call.1} parent=0
    #allocation2 [shape = 'u8[131072]{0}', space=vmem, size = 0x20000, scoped, tag = 'input window, operand 0']
    #allocation3 [shape = 's32[2]{0}', space=sflag, size = 0x8, scoped, tag = 'scoped memory for tpu_custom_call.1']
    #allocation4 [shape = 's32[2]{0}', space=sflag, size = 0x8, scoped, tag = 'scoped memory for tpu_custom_call.1']
    #allocation5 [shape = 'u8[131072]{0}', space=vmem, size = 0x20000, scoped, tag = 'input window, operand 1, single buffered']
    #allocation6 [shape = 's32[1]{0}', space=sflag, size = 0x4, scoped, tag = 'scoped memory for tpu_custom_call.1']
    #allocation7 [shape = 'u8[65536]{0}', space=vmem, size = 0x10000, scoped, tag = 'input window, operand 3, single buffered']
    #allocation8 [shape = 'u8[131072]{0}', space=vmem, size = 0x20000, scoped, tag = 'output window, operand 0']
    %10 = vsyncpa [#allocation3], 0
    %s11 = scalar_lea.sflag [#allocation3], 1
    %12 = vsyncpa %s11, 0
    %13 = vsyncpa [#allocation6], 0
    %14 = vsyncpa [#allocation4], 0
    %s15 = scalar_lea.sflag [#allocation4], 1
    %16 = vsyncpa %s15, 0
    loop: start=0, step=1, limit=4
    $region2: #{tpu_custom_call.1} parent=1 // loop_pre_header
      _
    $region3: #{tpu_custom_call.1} parent=1 // loop_header
      %s18 = sphi 0, %s22
      %p19 = scmp.ge.s32.totalorder %s18, 4
      %s28 = sphi 0, %s30
      %s31 = sphi 0, %s28
      %s32 = sphi 0, %s31
      %s48 = sphi 0, %s32
      %s52 = sphi 0, %s52
      %s54 = sphi 0, %s52
      %s55 = sphi 0, %s54
      %s69 = sphi 0, %s55
      %s73 = sphi 0, %s73
      %s75 = sphi 0, %s73
      %s76 = sphi 0, %s75
      %s90 = sphi 0, %s76
      %s94 = sphi 0, %s94
      %s96 = sphi 0, %s94
      %s97 = sphi 0, %s96
      %s111 = sphi 0, %s97
      %s115 = sphi 0, %s115
      %s117 = sphi 0, %s115
      %s118 = sphi 0, %s117
      %s132 = sphi 0, %s118
      %s138 = sphi 0, %s140
      %s141 = sphi 0, %s138
      %s142 = sphi 0, %s141
      %s158 = sphi 0, %s142
    $region4: #{tpu_custom_call.1} parent=1 // loop_header_branch
      %21 = sbr.rel (%p19) target = $region8
    $region5: #{tpu_custom_call.1} parent=1 // loop_body
      %s23 = ssub.s32 %s18, 1
      %s24 = ssub.s32 %s18, 2
      %s25 = sadd.s32 %s18, 1
      %s26 = ssub.s32 %s18, %s25
      %p27 = scmp.eq.s32.totalorder %s26, 0
      %s29 = sadd.s32 %s28, 1
      %s30 = scalar_select %p27, %s28, %s29
      %p33 = pneg %p27
      %p34 = scmp.eq.s32.totalorder %s18, 1
      %p35 = por %p33, %p34
      %p36 = scmp.ne.s32.totalorder %s28, %s31
      %p37 = scmp.eq.s32.totalorder %s18, 0
      %p38 = por %p36, %p37
      %p39 = scmp.ne.s32.totalorder %s28, %s31
      %p40 = scmp.eq.s32.totalorder %s23, 1
      %p41 = por %p39, %p40
      %p42 = scmp.ne.s32.totalorder %s31, %s32
      %p43 = scmp.eq.s32.totalorder %s23, 0
      %p44 = por %p42, %p43
      %p45 = scmp.ne.s32.totalorder %s31, %s32
      %p46 = scmp.eq.s32.totalorder %s24, 1
      %p47 = por %p45, %p46
      %p49 = scmp.ne.s32.totalorder %s32, %s48
      %p50 = scmp.eq.s32.totalorder %s24, 0
      %p51 = por %p49, %p50
      %s53 = sadd.s32 %s52, 1
      %p56 = scmp.eq.s32.totalorder %s18, 1
      %p57 = scmp.ne.s32.totalorder %s52, %s54
      %p58 = scmp.eq.s32.totalorder %s18, 0
      %p59 = por %p57, %p58
      %p60 = scmp.ne.s32.totalorder %s52, %s54
      %p61 = scmp.eq.s32.totalorder %s23, 1
      %p62 = por %p60, %p61
      %p63 = scmp.ne.s32.totalorder %s54, %s55
      %p64 = scmp.eq.s32.totalorder %s23, 0
      %p65 = por %p63, %p64
      %p66 = scmp.ne.s32.totalorder %s54, %s55
      %p67 = scmp.eq.s32.totalorder %s24, 1
      %p68 = por %p66, %p67
      %p70 = scmp.ne.s32.totalorder %s55, %s69
      %p71 = scmp.eq.s32.totalorder %s24, 0
      %p72 = por %p70, %p71
      %s74 = sadd.s32 %s73, 1
      %p77 = scmp.eq.s32.totalorder %s18, 1
      %p78 = scmp.ne.s32.totalorder %s73, %s75
      %p79 = scmp.eq.s32.totalorder %s18, 0
      %p80 = por %p78, %p79
      %p81 = scmp.ne.s32.totalorder %s73, %s75
      %p82 = scmp.eq.s32.totalorder %s23, 1
      %p83 = por %p81, %p82
      %p84 = scmp.ne.s32.totalorder %s75, %s76
      %p85 = scmp.eq.s32.totalorder %s23, 0
      %p86 = por %p84, %p85
      %p87 = scmp.ne.s32.totalorder %s75, %s76
      %p88 = scmp.eq.s32.totalorder %s24, 1
      %p89 = por %p87, %p88
      %p91 = scmp.ne.s32.totalorder %s76, %s90
      %p92 = scmp.eq.s32.totalorder %s24, 0
      %p93 = por %p91, %p92
      %s95 = sadd.s32 %s94, 1
      %p98 = scmp.eq.s32.totalorder %s18, 1
      %p99 = scmp.ne.s32.totalorder %s94, %s96
      %p100 = scmp.eq.s32.totalorder %s18, 0
      %p101 = por %p99, %p100
      %p102 = scmp.ne.s32.totalorder %s94, %s96
      %p103 = scmp.eq.s32.totalorder %s23, 1
      %p104 = por %p102, %p103
      %p105 = scmp.ne.s32.totalorder %s96, %s97
      %p106 = scmp.eq.s32.totalorder %s23, 0
      %p107 = por %p105, %p106
      %p108 = scmp.ne.s32.totalorder %s96, %s97
      %p109 = scmp.eq.s32.totalorder %s24, 1
      %p110 = por %p108, %p109
      %p112 = scmp.ne.s32.totalorder %s97, %s111
      %p113 = scmp.eq.s32.totalorder %s24, 0
      %p114 = por %p112, %p113
      %s116 = sadd.s32 %s115, 1
      %p119 = scmp.eq.s32.totalorder %s18, 1
      %p120 = scmp.ne.s32.totalorder %s115, %s117
      %p121 = scmp.eq.s32.totalorder %s18, 0
      %p122 = por %p120, %p121
      %p123 = scmp.ne.s32.totalorder %s115, %s117
      %p124 = scmp.eq.s32.totalorder %s23, 1
      %p125 = por %p123, %p124
      %p126 = scmp.ne.s32.totalorder %s117, %s118
      %p127 = scmp.eq.s32.totalorder %s23, 0
      %p128 = por %p126, %p127
      %p129 = scmp.ne.s32.totalorder %s117, %s118
      %p130 = scmp.eq.s32.totalorder %s24, 1
      %p131 = por %p129, %p130
      %p133 = scmp.ne.s32.totalorder %s118, %s132
      %p134 = scmp.eq.s32.totalorder %s24, 0
      %p135 = por %p133, %p134
      %s136 = ssub.s32 %s18, %s25
      %p137 = scmp.eq.s32.totalorder %s136, 0
      %s139 = sadd.s32 %s138, 1
      %s140 = scalar_select %p137, %s138, %s139
      %p143 = pneg %p137
      %p144 = scmp.eq.s32.totalorder %s18, 1
      %p145 = por %p143, %p144
      %p146 = scmp.ne.s32.totalorder %s138, %s141
      %p147 = scmp.eq.s32.totalorder %s18, 0
      %p148 = por %p146, %p147
      %p149 = scmp.ne.s32.totalorder %s138, %s141
      %p150 = scmp.eq.s32.totalorder %s23, 1
      %p151 = por %p149, %p150
      %p152 = scmp.ne.s32.totalorder %s141, %s142
      %p153 = scmp.eq.s32.totalorder %s23, 0
      %p154 = por %p152, %p153
      %p155 = scmp.ne.s32.totalorder %s141, %s142
      %p156 = scmp.eq.s32.totalorder %s24, 1
      %p157 = por %p155, %p156
      %p159 = scmp.ne.s32.totalorder %s142, %s158
      %p160 = scmp.eq.s32.totalorder %s24, 0
      %p161 = por %p159, %p160
      %p162 = scmp.le.s32.totalorder 1, %s18
      %p163 = scmp.lt.s32.totalorder %s18, 3
      %p164 = pnand %p162, %p163
      %p165 = pneg %p164
      // Predicated region
      $region9: #{tpu_custom_call.1} parent=5 // pred_check
        _
      $region10: #{tpu_custom_call.1} parent=5 // pred_check_branch
        %167 = sbr.rel (%p164) target = $region12
      $region11: #{tpu_custom_call.1} parent=5 // pred_region
        %s168 = ssub.s32 %s18, 1
        // Predicated region
        $region13: #{tpu_custom_call.1} parent=11 // pred_check
          %p169 = pneg %p65
        $region14: #{tpu_custom_call.1} parent=11 // pred_check_branch
          %171 = sbr.rel (%p169) target = $region16
        $region15: #{tpu_custom_call.1} parent=11 // pred_region
          %s173 = ssub.s32 4096, 4096
          %174 = vsyncadd [#allocation6], %s173
          %s175 = sshll.u32 [#allocation5], 4
          %s176 = int_to_ptr.vmem [resolvable:$true] %s175
          %181 = dma.hbm_to_vmem [thread:$0]  %s1, 4096, %s176, [#allocation6], 128, 128, 8
        $region16: #{tpu_custom_call.1} parent=11 // pred_fallthru
          _
        // Predicated region
        $region17: #{tpu_custom_call.1} parent=11 // pred_check
          %p182 = pneg %p86
        $region18: #{tpu_custom_call.1} parent=11 // pred_check_branch
          %184 = sbr.rel (%p182) target = $region20
        $region19: #{tpu_custom_call.1} parent=11 // pred_region
          _
        $region20: #{tpu_custom_call.1} parent=11 // pred_fallthru
          _
        // Predicated region
        $region21: #{tpu_custom_call.1} parent=11 // pred_check
          %p185 = pneg %p107
        $region22: #{tpu_custom_call.1} parent=11 // pred_check_branch
          %187 = sbr.rel (%p185) target = $region24
        $region23: #{tpu_custom_call.1} parent=11 // pred_region
          %s189 = ssub.s32 2048, 2048
          %190 = vsyncadd [#allocation6], %s189
          %s191 = sshll.u32 [#allocation7], 4
          %s192 = int_to_ptr.vmem [resolvable:$true] %s191
          %197 = dma.hbm_to_vmem [thread:$0]  %s3, 2048, %s192, [#allocation6], 64, 64, 4
        $region24: #{tpu_custom_call.1} parent=11 // pred_fallthru
          _
        // Predicated region
        $region25: #{tpu_custom_call.1} parent=11 // pred_check
          %p198 = pneg %p128
        $region26: #{tpu_custom_call.1} parent=11 // pred_check_branch
          %200 = sbr.rel (%p198) target = $region28
        $region27: #{tpu_custom_call.1} parent=11 // pred_region
          _
        $region28: #{tpu_custom_call.1} parent=11 // pred_fallthru
          _
      $region12: #{tpu_custom_call.1} parent=5 // pred_fallthru
        _
      %p201 = scmp.lt.s32.totalorder %s18, 2
      // Predicated region
      $region29: #{tpu_custom_call.1} parent=5 // pred_check
        %p202 = pneg %p201
      $region30: #{tpu_custom_call.1} parent=5 // pred_check_branch
        %204 = sbr.rel (%p202) target = $region32
      $region31: #{tpu_custom_call.1} parent=5 // pred_region
        // Predicated region
        $region33: #{tpu_custom_call.1} parent=31 // pred_check
          %p205 = pneg %p38
        $region34: #{tpu_custom_call.1} parent=31 // pred_check_branch
          %207 = sbr.rel (%p205) target = $region36
        $region35: #{tpu_custom_call.1} parent=31 // pred_region
          %s208 = sand.u32 %s28, 1
          %s209 = scalar_lea.sflag [#allocation3], %s208
          %s210 = sand.u32 %s28, 1
          %s211 = smul.addr %s210, 128
          %s212 = scalar_lea.vmem [#allocation2], %s211
          %s213 = smul.u32 16, %s18
          %s215 = ssub.s32 2048, 2048
          %216 = vsyncadd %s209, %s215
          %s217 = smul.addr %s213, 2
          %s218 = smul.addr %s217, 64
          %s219 = scalar_lea.hbm %s0, %s218
          %s220 = sshll.u32 %s212, 4
          %s221 = int_to_ptr.vmem [resolvable:$true] %s220
          %226 = dma.hbm_to_vmem [thread:$0]  %s219, 2048, %s221, %s209, 128, 128, 8
        $region36: #{tpu_custom_call.1} parent=31 // pred_fallthru
          _
      $region32: #{tpu_custom_call.1} parent=5 // pred_fallthru
        _
      %p227 = scmp.le.s32.totalorder 1, %s18
      %p228 = scmp.lt.s32.totalorder %s18, 3
      %p229 = pnand %p227, %p228
      %p230 = pneg %p229
      // Predicated region
      $region37: #{tpu_custom_call.1} parent=5 // pred_check
        _
      $region38: #{tpu_custom_call.1} parent=5 // pred_check_branch
        %232 = sbr.rel (%p229) target = $region40
      $region39: #{tpu_custom_call.1} parent=5 // pred_region
        %s233 = ssub.s32 %s18, 1
        %s234 = sand.u32 %s31, 1
        %s235 = scalar_lea.sflag [#allocation3], %s234
        %s236 = sand.u32 %s31, 1
        %s237 = smul.addr %s236, 128
        %s238 = scalar_lea.vmem [#allocation2], %s237
        // Predicated region
        $region41: #{tpu_custom_call.1} parent=39 // pred_check
          %p239 = pneg %p44
        $region42: #{tpu_custom_call.1} parent=39 // pred_check_branch
          %241 = sbr.rel (%p239) target = $region44
        $region43: #{tpu_custom_call.1} parent=39 // pred_region
          %242 = dma.done %s235, 2048
        $region44: #{tpu_custom_call.1} parent=39 // pred_fallthru
          _
        // Predicated region
        $region45: #{tpu_custom_call.1} parent=39 // pred_check
          %p243 = pneg %p65
        $region46: #{tpu_custom_call.1} parent=39 // pred_check_branch
          %245 = sbr.rel (%p243) target = $region48
        $region47: #{tpu_custom_call.1} parent=39 // pred_region
          %246 = dma.done [#allocation6], 4096
        $region48: #{tpu_custom_call.1} parent=39 // pred_fallthru
          _
        // Predicated region
        $region49: #{tpu_custom_call.1} parent=39 // pred_check
          %p247 = pneg %p107
        $region50: #{tpu_custom_call.1} parent=39 // pred_check_branch
          %249 = sbr.rel (%p247) target = $region52
        $region51: #{tpu_custom_call.1} parent=39 // pred_region
          %250 = dma.done [#allocation6], 2048
        $region52: #{tpu_custom_call.1} parent=39 // pred_fallthru
          _
        %s251 = sand.u32 %s31, 1
        %s252 = scalar_lea.sflag [#allocation3], %s251
        %s253 = sand.u32 %s31, 1
        %s254 = smul.addr %s253, 128
        %s255 = scalar_lea.vmem [#allocation2], %s254
        %p256 = pneg %p44
        %p257 = pneg %p41
        %p258 = pneg %p65
        %p259 = pneg %p62
        %p260 = pneg %p86
        %p261 = pneg %p83
        %p262 = pneg %p107
        %p263 = pneg %p104
        %p264 = pneg %p128
        %p265 = pneg %p125
        %p266 = pneg %p154
        %p267 = pneg %p151
        %s268 = sand.u32 %s141, 1
        %s269 = scalar_lea.sflag [#allocation4], %s268
        %s270 = sand.u32 %s141, 1
        %s271 = smul.addr %s270, 128
        %s272 = scalar_lea.vmem [#allocation8], %s271
        %s273 = smul.u32 16, %s23
        %s274 = smul.u32 16, %s23
        %v276 = vld [vmem:[%s238] sm:$0xff]
        %v277 = vld [vmem:[%s238 + $0x8] sm:$0xff]
        %v278 = vld [vmem:[%s238 + $0x10] sm:$0xff]
        %v279 = vld [vmem:[%s238 + $0x18] sm:$0xff]
        %v280 = vld [vmem:[%s238 + $0x20] sm:$0xff]
        %v281 = vld [vmem:[%s238 + $0x28] sm:$0xff]
        %v282 = vld [vmem:[%s238 + $0x30] sm:$0xff]
        %v283 = vld [vmem:[%s238 + $0x38] sm:$0xff]
        %v284 = vld [vmem:[%s238 + $0x40] sm:$0xff]
        %v285 = vld [vmem:[%s238 + $0x48] sm:$0xff]
        %v286 = vld [vmem:[%s238 + $0x50] sm:$0xff]
        %v287 = vld [vmem:[%s238 + $0x58] sm:$0xff]
        %v288 = vld [vmem:[%s238 + $0x60] sm:$0xff]
        %v289 = vld [vmem:[%s238 + $0x68] sm:$0xff]
        %v290 = vld [vmem:[%s238 + $0x70] sm:$0xff]
        %v291 = vld [vmem:[%s238 + $0x78] sm:$0xff]
        %v292 = vld [vmem:[#allocation5] sm:$0xff]
        %v293 = vld [vmem:[#allocation5 + $0x8] sm:$0xff]
        %v294 = vld [vmem:[#allocation5 + $0x10] sm:$0xff]
        %v295 = vld [vmem:[#allocation5 + $0x18] sm:$0xff]
        %v296 = vld [vmem:[#allocation5 + $0x20] sm:$0xff]
        %v297 = vld [vmem:[#allocation5 + $0x28] sm:$0xff]
        %v298 = vld [vmem:[#allocation5 + $0x30] sm:$0xff]
        %v299 = vld [vmem:[#allocation5 + $0x38] sm:$0xff]
        %v300 = vld [vmem:[#allocation5 + $0x40] sm:$0xff]
        %v301 = vld [vmem:[#allocation5 + $0x48] sm:$0xff]
        %v302 = vld [vmem:[#allocation5 + $0x50] sm:$0xff]
        %v303 = vld [vmem:[#allocation5 + $0x58] sm:$0xff]
        %v304 = vld [vmem:[#allocation5 + $0x60] sm:$0xff]
        %v305 = vld [vmem:[#allocation5 + $0x68] sm:$0xff]
        %v306 = vld [vmem:[#allocation5 + $0x70] sm:$0xff]
        %v307 = vld [vmem:[#allocation5 + $0x78] sm:$0xff]
        %v308 = vld [vmem:[#allocation5 + $0x80] sm:$0xff]
        %v309 = vld [vmem:[#allocation5 + $0x88] sm:$0xff]
        %v310 = vld [vmem:[#allocation5 + $0x90] sm:$0xff]
        %v311 = vld [vmem:[#allocation5 + $0x98] sm:$0xff]
        %v312 = vld [vmem:[#allocation5 + $0xa0] sm:$0xff]
        %v313 = vld [vmem:[#allocation5 + $0xa8] sm:$0xff]
        %v314 = vld [vmem:[#allocation5 + $0xb0] sm:$0xff]
        %v315 = vld [vmem:[#allocation5 + $0xb8] sm:$0xff]
        %v316 = vld [vmem:[#allocation5 + $0xc0] sm:$0xff]
        %v317 = vld [vmem:[#allocation5 + $0xc8] sm:$0xff]
        %v318 = vld [vmem:[#allocation5 + $0xd0] sm:$0xff]
        %v319 = vld [vmem:[#allocation5 + $0xd8] sm:$0xff]
        %v320 = vld [vmem:[#allocation5 + $0xe0] sm:$0xff]
        %v321 = vld [vmem:[#allocation5 + $0xe8] sm:$0xff]
        %v322 = vld [vmem:[#allocation5 + $0xf0] sm:$0xff]
        %v323 = vld [vmem:[#allocation5 + $0xf8] sm:$0xff]
        %v324 = vld [vmem:[%s2] sm:$0x3]
        %v326 = vlaneseq
        %v327 = vshrl.u32 %v326, 7
        %v328 = vsub.s32 0, %v327
        %v329 = vrot.slane %v324, %v328
        %v330 = vlaneseq
        %v331 = vshrl.u32 %v330, 7
        %v332 = vsub.s32 1, %v331
        %v333 = vrot.slane %v324, %v332
        %v352 = vunpack.c.l.b16 %v276
        %v353 = vunpack.c.h.b16 %v276
        %v354 = vunpack.c.l.b16 %v277
        %v355 = vunpack.c.h.b16 %v277
        %v356 = vunpack.c.l.b16 %v278
        %v357 = vunpack.c.h.b16 %v278
        %v358 = vunpack.c.l.b16 %v279
        %v359 = vunpack.c.h.b16 %v279
        %v360 = vunpack.c.l.b16 %v280
        %v361 = vunpack.c.h.b16 %v280
        %v362 = vunpack.c.l.b16 %v281
        %v363 = vunpack.c.h.b16 %v281
        %v364 = vunpack.c.l.b16 %v282
        %v365 = vunpack.c.h.b16 %v282
        %v366 = vunpack.c.l.b16 %v283
        %v367 = vunpack.c.h.b16 %v283
        %v368 = vunpack.c.l.b16 %v284
        %v369 = vunpack.c.h.b16 %v284
        %v370 = vunpack.c.l.b16 %v285
        %v371 = vunpack.c.h.b16 %v285
        %v372 = vunpack.c.l.b16 %v286
        %v373 = vunpack.c.h.b16 %v286
        %v374 = vunpack.c.l.b16 %v287
        %v375 = vunpack.c.h.b16 %v287
        %v376 = vunpack.c.l.b16 %v288
        %v377 = vunpack.c.h.b16 %v288
        %v378 = vunpack.c.l.b16 %v289
        %v379 = vunpack.c.h.b16 %v289
        %v380 = vunpack.c.l.b16 %v290
        %v381 = vunpack.c.h.b16 %v290
        %v382 = vunpack.c.l.b16 %v291
        %v383 = vunpack.c.h.b16 %v291
        %v384 = vpack.c.b16 %v354, %v352
        %v385 = vpack.c.b16 %v355, %v353
        %v386 = vpack.c.b16 %v358, %v356
        %v387 = vpack.c.b16 %v359, %v357
        %v388 = vpack.c.b16 %v362, %v360
        %v389 = vpack.c.b16 %v363, %v361
        %v390 = vpack.c.b16 %v366, %v364
        %v391 = vpack.c.b16 %v367, %v365
        %v392 = vpack.c.b16 %v370, %v368
        %v393 = vpack.c.b16 %v371, %v369
        %v394 = vpack.c.b16 %v374, %v372
        %v395 = vpack.c.b16 %v375, %v373
        %v396 = vpack.c.b16 %v378, %v376
        %v397 = vpack.c.b16 %v379, %v377
        %v398 = vpack.c.b16 %v382, %v380
        %v399 = vpack.c.b16 %v383, %v381
        %v448 = vunpack.c.l.b16 %v292
        %v449 = vunpack.c.h.b16 %v292
        %v450 = vunpack.c.l.b16 %v293
        %v451 = vunpack.c.h.b16 %v293
        %v452 = vunpack.c.l.b16 %v294
        %v453 = vunpack.c.h.b16 %v294
        %v454 = vunpack.c.l.b16 %v295
        %v455 = vunpack.c.h.b16 %v295
        %v456 = vunpack.c.l.b16 %v296
        %v457 = vunpack.c.h.b16 %v296
        %v458 = vunpack.c.l.b16 %v297
        %v459 = vunpack.c.h.b16 %v297
        %v460 = vunpack.c.l.b16 %v298
        %v461 = vunpack.c.h.b16 %v298
        %v462 = vunpack.c.l.b16 %v299
        %v463 = vunpack.c.h.b16 %v299
        %v464 = vunpack.c.l.b16 %v300
        %v465 = vunpack.c.h.b16 %v300
        %v466 = vunpack.c.l.b16 %v301
        %v467 = vunpack.c.h.b16 %v301
        %v468 = vunpack.c.l.b16 %v302
        %v469 = vunpack.c.h.b16 %v302
        %v470 = vunpack.c.l.b16 %v303
        %v471 = vunpack.c.h.b16 %v303
        %v472 = vunpack.c.l.b16 %v304
        %v473 = vunpack.c.h.b16 %v304
        %v474 = vunpack.c.l.b16 %v305
        %v475 = vunpack.c.h.b16 %v305
        %v476 = vunpack.c.l.b16 %v306
        %v477 = vunpack.c.h.b16 %v306
        %v478 = vunpack.c.l.b16 %v307
        %v479 = vunpack.c.h.b16 %v307
        %v480 = vunpack.c.l.b16 %v308
        %v481 = vunpack.c.h.b16 %v308
        %v482 = vunpack.c.l.b16 %v309
        %v483 = vunpack.c.h.b16 %v309
        %v484 = vunpack.c.l.b16 %v310
        %v485 = vunpack.c.h.b16 %v310
        %v486 = vunpack.c.l.b16 %v311
        %v487 = vunpack.c.h.b16 %v311
        %v488 = vunpack.c.l.b16 %v312
        %v489 = vunpack.c.h.b16 %v312
        %v490 = vunpack.c.l.b16 %v313
        %v491 = vunpack.c.h.b16 %v313
        %v492 = vunpack.c.l.b16 %v314
        %v493 = vunpack.c.h.b16 %v314
        %v494 = vunpack.c.l.b16 %v315
        %v495 = vunpack.c.h.b16 %v315
        %v496 = vunpack.c.l.b16 %v316
        %v497 = vunpack.c.h.b16 %v316
        %v498 = vunpack.c.l.b16 %v317
        %v499 = vunpack.c.h.b16 %v317
        %v500 = vunpack.c.l.b16 %v318
        %v501 = vunpack.c.h.b16 %v318
        %v502 = vunpack.c.l.b16 %v319
        %v503 = vunpack.c.h.b16 %v319
        %v504 = vunpack.c.l.b16 %v320
        %v505 = vunpack.c.h.b16 %v320
        %v506 = vunpack.c.l.b16 %v321
        %v507 = vunpack.c.h.b16 %v321
        %v508 = vunpack.c.l.b16 %v322
        %v509 = vunpack.c.h.b16 %v322
        %v510 = vunpack.c.l.b16 %v323
        %v511 = vunpack.c.h.b16 %v323
        %v512 = vpack.c.b16 %v450, %v448
        %v513 = vpack.c.b16 %v451, %v449
        %v514 = vpack.c.b16 %v454, %v452
        %v515 = vpack.c.b16 %v455, %v453
        %v516 = vpack.c.b16 %v458, %v456
        %v517 = vpack.c.b16 %v459, %v457
        %v518 = vpack.c.b16 %v462, %v460
        %v519 = vpack.c.b16 %v463, %v461
        %v520 = vpack.c.b16 %v466, %v464
        %v521 = vpack.c.b16 %v467, %v465
        %v522 = vpack.c.b16 %v470, %v468
        %v523 = vpack.c.b16 %v471, %v469
        %v524 = vpack.c.b16 %v474, %v472
        %v525 = vpack.c.b16 %v475, %v473
        %v526 = vpack.c.b16 %v478, %v476
        %v527 = vpack.c.b16 %v479, %v477
        %v528 = vpack.c.b16 %v482, %v480
        %v529 = vpack.c.b16 %v483, %v481
        %v530 = vpack.c.b16 %v486, %v484
        %v531 = vpack.c.b16 %v487, %v485
        %v532 = vpack.c.b16 %v490, %v488
        %v533 = vpack.c.b16 %v491, %v489
        %v534 = vpack.c.b16 %v494, %v492
        %v535 = vpack.c.b16 %v495, %v493
        %v536 = vpack.c.b16 %v498, %v496
        %v537 = vpack.c.b16 %v499, %v497
        %v538 = vpack.c.b16 %v502, %v500
        %v539 = vpack.c.b16 %v503, %v501
        %v540 = vpack.c.b16 %v506, %v504
        %v541 = vpack.c.b16 %v507, %v505
        %v542 = vpack.c.b16 %v510, %v508
        %v543 = vpack.c.b16 %v511, %v509
        %576 = vmatprep.subr.bf16.mxu0 %v513
        %577 = vmatpush1.bf16.msra.mxu0 %v512
        %578 = vmatprep.subr.bf16.mxu0 %v515
        %579 = vmatpush1.bf16.msra.mxu0 %v514
        %580 = vmatprep.subr.bf16.mxu0 %v517
        %581 = vmatpush1.bf16.msra.mxu0 %v516
        %582 = vmatprep.subr.bf16.mxu0 %v519
        %583 = vmatpush1.bf16.msra.mxu0 %v518
        %584 = vmatprep.subr.bf16.mxu0 %v521
        %585 = vmatpush1.bf16.msra.mxu0 %v520
        %586 = vmatprep.subr.bf16.mxu0 %v523
        %587 = vmatpush1.bf16.msra.mxu0 %v522
        %588 = vmatprep.subr.bf16.mxu0 %v525
        %589 = vmatpush1.bf16.msra.mxu0 %v524
        %590 = vmatprep.subr.bf16.mxu0 %v527
        %591 = vmatpush1.bf16.msra.mxu0 %v526
        %592 = vmatprep.subr.bf16.mxu0 %v529
        %593 = vmatpush1.bf16.msra.mxu0 %v528
        %594 = vmatprep.subr.bf16.mxu0 %v531
        %595 = vmatpush1.bf16.msra.mxu0 %v530
        %596 = vmatprep.subr.bf16.mxu0 %v533
        %597 = vmatpush1.bf16.msra.mxu0 %v532
        %598 = vmatprep.subr.bf16.mxu0 %v535
        %599 = vmatpush1.bf16.msra.mxu0 %v534
        %600 = vmatprep.subr.bf16.mxu0 %v537
        %601 = vmatpush1.bf16.msra.mxu0 %v536
        %602 = vmatprep.subr.bf16.mxu0 %v539
        %603 = vmatpush1.bf16.msra.mxu0 %v538
        %604 = vmatprep.subr.bf16.mxu0 %v541
        %605 = vmatpush1.bf16.msra.mxu0 %v540
        %606 = vmatprep.subr.bf16.mxu0 %v543
        %607 = vmatpush1.bf16.msra.mxu0 %v542
        %608 = vmatprep.mubr.bf16.mxu0 %v385
        %609 = vmatmul.mubr.bf16.gmra.mrb[0].mxu0 %v384
        %v610 = vpop.f32.mrb[0].mxu0
        %v611 = vadd.f32 %v329, %v610
        %v612 = vpop.f32.mrb[0].mxu0
        %v613 = vadd.f32 %v333, %v612
        %v614 = vpop.f32.mrb[0].mxu0
        %v615 = vadd.f32 %v329, %v614
        %v616 = vpop.f32.mrb[0].mxu0
        %v617 = vadd.f32 %v333, %v616
        %618 = vmatprep.mubr.bf16.mxu0 %v387
        %619 = vmatmul.mubr.bf16.gmra.mrb[0].mxu0 %v386
        %v620 = vpop.f32.mrb[0].mxu0
        %v621 = vadd.f32 %v329, %v620
        %v622 = vpop.f32.mrb[0].mxu0
        %v623 = vadd.f32 %v333, %v622
        %v624 = vpop.f32.mrb[0].mxu0
        %v625 = vadd.f32 %v329, %v624
        %v626 = vpop.f32.mrb[0].mxu0
        %v627 = vadd.f32 %v333, %v626
        %628 = vmatprep.mubr.bf16.mxu0 %v389
        %629 = vmatmul.mubr.bf16.gmra.mrb[0].mxu0 %v388
        %v630 = vpop.f32.mrb[0].mxu0
        %v631 = vadd.f32 %v329, %v630
        %v632 = vpop.f32.mrb[0].mxu0
        %v633 = vadd.f32 %v333, %v632
        %v634 = vpop.f32.mrb[0].mxu0
        %v635 = vadd.f32 %v329, %v634
        %v636 = vpop.f32.mrb[0].mxu0
        %v637 = vadd.f32 %v333, %v636
        %638 = vmatprep.mubr.bf16.mxu0 %v391
        %639 = vmatmul.mubr.bf16.gmra.mrb[0].mxu0 %v390
        %v640 = vpop.f32.mrb[0].mxu0
        %v641 = vadd.f32 %v329, %v640
        %v642 = vpop.f32.mrb[0].mxu0
        %v643 = vadd.f32 %v333, %v642
        %v644 = vpop.f32.mrb[0].mxu0
        %v645 = vadd.f32 %v329, %v644
        %v646 = vpop.f32.mrb[0].mxu0
        %v647 = vadd.f32 %v333, %v646
        %648 = vmatprep.mubr.bf16.mxu0 %v393
        %649 = vmatmul.mubr.bf16.gmra.mrb[0].mxu0 %v392
        %v650 = vpop.f32.mrb[0].mxu0
        %v651 = vadd.f32 %v329, %v650
        %v652 = vpop.f32.mrb[0].mxu0
        %v653 = vadd.f32 %v333, %v652
        %v654 = vpop.f32.mrb[0].mxu0
        %v655 = vadd.f32 %v329, %v654
        %v656 = vpop.f32.mrb[0].mxu0
        %v657 = vadd.f32 %v333, %v656
        %658 = vmatprep.mubr.bf16.mxu0 %v395
        %659 = vmatmul.mubr.bf16.gmra.mrb[0].mxu0 %v394
        %v660 = vpop.f32.mrb[0].mxu0
        %v661 = vadd.f32 %v329, %v660
        %v662 = vpop.f32.mrb[0].mxu0
        %v663 = vadd.f32 %v333, %v662
        %v664 = vpop.f32.mrb[0].mxu0
        %v665 = vadd.f32 %v329, %v664
        %v666 = vpop.f32.mrb[0].mxu0
        %v667 = vadd.f32 %v333, %v666
        %668 = vmatprep.mubr.bf16.mxu0 %v397
        %669 = vmatmul.mubr.bf16.gmra.mrb[0].mxu0 %v396
        %v670 = vpop.f32.mrb[0].mxu0
        %v671 = vadd.f32 %v329, %v670
        %v672 = vpop.f32.mrb[0].mxu0
        %v673 = vadd.f32 %v333, %v672
        %v674 = vpop.f32.mrb[0].mxu0
        %v675 = vadd.f32 %v329, %v674
        %v676 = vpop.f32.mrb[0].mxu0
        %v677 = vadd.f32 %v333, %v676
        %678 = vmatprep.mubr.bf16.mxu0 %v399
        %679 = vmatmul.mubr.bf16.gmra.mrb[0].mxu0 %v398
        %v680 = vpop.f32.mrb[0].mxu0
        %v681 = vadd.f32 %v329, %v680
        %v682 = vpop.f32.mrb[0].mxu0
        %v683 = vadd.f32 %v333, %v682
        %v684 = vpop.f32.mrb[0].mxu0
        %v685 = vadd.f32 %v329, %v684
        %v686 = vpop.f32.mrb[0].mxu0
        %v687 = vadd.f32 %v333, %v686
        %688 = vdwg.mxu0
        %v689 = vxor.u32 %v611, 2147483648
        %v690 = vxor.u32 %v613, 2147483648
        %v691 = vxor.u32 %v615, 2147483648
        %v692 = vxor.u32 %v617, 2147483648
        %v693 = vxor.u32 %v621, 2147483648
        %v694 = vxor.u32 %v623, 2147483648
        %v695 = vxor.u32 %v625, 2147483648
        %v696 = vxor.u32 %v627, 2147483648
        %v697 = vxor.u32 %v631, 2147483648
        %v698 = vxor.u32 %v633, 2147483648
        %v699 = vxor.u32 %v635, 2147483648
        %v700 = vxor.u32 %v637, 2147483648
        %v701 = vxor.u32 %v641, 2147483648
        %v702 = vxor.u32 %v643, 2147483648
        %v703 = vxor.u32 %v645, 2147483648
        %v704 = vxor.u32 %v647, 2147483648
        %v705 = vxor.u32 %v651, 2147483648
        %v706 = vxor.u32 %v653, 2147483648
        %v707 = vxor.u32 %v655, 2147483648
        %v708 = vxor.u32 %v657, 2147483648
        %v709 = vxor.u32 %v661, 2147483648
        %v710 = vxor.u32 %v663, 2147483648
        %v711 = vxor.u32 %v665, 2147483648
        %v712 = vxor.u32 %v667, 2147483648
        %v713 = vxor.u32 %v671, 2147483648
        %v714 = vxor.u32 %v673, 2147483648
        %v715 = vxor.u32 %v675, 2147483648
        %v716 = vxor.u32 %v677, 2147483648
        %v717 = vxor.u32 %v681, 2147483648
        %v718 = vxor.u32 %v683, 2147483648
        %v719 = vxor.u32 %v685, 2147483648
        %v720 = vxor.u32 %v687, 2147483648
        %v721 = vmul.f32 %v689, 1.442695
        %v722 = vpow.pop %v721
        %v723 = vmul.f32 %v690, 1.442695
        %v724 = vpow.pop %v723
        %v725 = vmul.f32 %v691, 1.442695
        %v726 = vpow.pop %v725
        %v727 = vmul.f32 %v692, 1.442695
        %v728 = vpow.pop %v727
        %v729 = vmul.f32 %v693, 1.442695
        %v730 = vpow.pop %v729
        %v731 = vmul.f32 %v694, 1.442695
        %v732 = vpow.pop %v731
        %v733 = vmul.f32 %v695, 1.442695
        %v734 = vpow.pop %v733
        %v735 = vmul.f32 %v696, 1.442695
        %v736 = vpow.pop %v735
        %v737 = vmul.f32 %v697, 1.442695
        %v738 = vpow.pop %v737
        %v739 = vmul.f32 %v698, 1.442695
        %v740 = vpow.pop %v739
        %v741 = vmul.f32 %v699, 1.442695
        %v742 = vpow.pop %v741
        %v743 = vmul.f32 %v700, 1.442695
        %v744 = vpow.pop %v743
        %v745 = vmul.f32 %v701, 1.442695
        %v746 = vpow.pop %v745
        %v747 = vmul.f32 %v702, 1.442695
        %v748 = vpow.pop %v747
        %v749 = vmul.f32 %v703, 1.442695
        %v750 = vpow.pop %v749
        %v751 = vmul.f32 %v704, 1.442695
        %v752 = vpow.pop %v751
        %v753 = vmul.f32 %v705, 1.442695
        %v754 = vpow.pop %v753
        %v755 = vmul.f32 %v706, 1.442695
        %v756 = vpow.pop %v755
        %v757 = vmul.f32 %v707, 1.442695
        %v758 = vpow.pop %v757
        %v759 = vmul.f32 %v708, 1.442695
        %v760 = vpow.pop %v759
        %v761 = vmul.f32 %v709, 1.442695
        %v762 = vpow.pop %v761
        %v763 = vmul.f32 %v710, 1.442695
        %v764 = vpow.pop %v763
        %v765 = vmul.f32 %v711, 1.442695
        %v766 = vpow.pop %v765
        %v767 = vmul.f32 %v712, 1.442695
        %v768 = vpow.pop %v767
        %v769 = vmul.f32 %v713, 1.442695
        %v770 = vpow.pop %v769
        %v771 = vmul.f32 %v714, 1.442695
        %v772 = vpow.pop %v771
        %v773 = vmul.f32 %v715, 1.442695
        %v774 = vpow.pop %v773
        %v775 = vmul.f32 %v716, 1.442695
        %v776 = vpow.pop %v775
        %v777 = vmul.f32 %v717, 1.442695
        %v778 = vpow.pop %v777
        %v779 = vmul.f32 %v718, 1.442695
        %v780 = vpow.pop %v779
        %v781 = vmul.f32 %v719, 1.442695
        %v782 = vpow.pop %v781
        %v783 = vmul.f32 %v720, 1.442695
        %v784 = vpow.pop %v783
        %v785 = vadd.f32 %v722, 1.0
        %v786 = vadd.f32 %v724, 1.0
        %v787 = vadd.f32 %v726, 1.0
        %v788 = vadd.f32 %v728, 1.0
        %v789 = vadd.f32 %v730, 1.0
        %v790 = vadd.f32 %v732, 1.0
        %v791 = vadd.f32 %v734, 1.0
        %v792 = vadd.f32 %v736, 1.0
        %v793 = vadd.f32 %v738, 1.0
        %v794 = vadd.f32 %v740, 1.0
        %v795 = vadd.f32 %v742, 1.0
        %v796 = vadd.f32 %v744, 1.0
        %v797 = vadd.f32 %v746, 1.0
        %v798 = vadd.f32 %v748, 1.0
        %v799 = vadd.f32 %v750, 1.0
        %v800 = vadd.f32 %v752, 1.0
        %v801 = vadd.f32 %v754, 1.0
        %v802 = vadd.f32 %v756, 1.0
        %v803 = vadd.f32 %v758, 1.0
        %v804 = vadd.f32 %v760, 1.0
        %v805 = vadd.f32 %v762, 1.0
        %v806 = vadd.f32 %v764, 1.0
        %v807 = vadd.f32 %v766, 1.0
        %v808 = vadd.f32 %v768, 1.0
        %v809 = vadd.f32 %v770, 1.0
        %v810 = vadd.f32 %v772, 1.0
        %v811 = vadd.f32 %v774, 1.0
        %v812 = vadd.f32 %v776, 1.0
        %v813 = vadd.f32 %v778, 1.0
        %v814 = vadd.f32 %v780, 1.0
        %v815 = vadd.f32 %v782, 1.0
        %v816 = vadd.f32 %v784, 1.0
        %v817 = vrcp.pop %v785
        %v818 = vmul.f32 1.0, %v817
        %v819 = vrcp.pop %v786
        %v820 = vmul.f32 1.0, %v819
        %v821 = vrcp.pop %v787
        %v822 = vmul.f32 1.0, %v821
        %v823 = vrcp.pop %v788
        %v824 = vmul.f32 1.0, %v823
        %v825 = vrcp.pop %v789
        %v826 = vmul.f32 1.0, %v825
        %v827 = vrcp.pop %v790
        %v828 = vmul.f32 1.0, %v827
        %v829 = vrcp.pop %v791
        %v830 = vmul.f32 1.0, %v829
        %v831 = vrcp.pop %v792
        %v832 = vmul.f32 1.0, %v831
        %v833 = vrcp.pop %v793
        %v834 = vmul.f32 1.0, %v833
        %v835 = vrcp.pop %v794
        %v836 = vmul.f32 1.0, %v835
        %v837 = vrcp.pop %v795
        %v838 = vmul.f32 1.0, %v837
        %v839 = vrcp.pop %v796
        %v840 = vmul.f32 1.0, %v839
        %v841 = vrcp.pop %v797
        %v842 = vmul.f32 1.0, %v841
        %v843 = vrcp.pop %v798
        %v844 = vmul.f32 1.0, %v843
        %v845 = vrcp.pop %v799
        %v846 = vmul.f32 1.0, %v845
        %v847 = vrcp.pop %v800
        %v848 = vmul.f32 1.0, %v847
        %v849 = vrcp.pop %v801
        %v850 = vmul.f32 1.0, %v849
        %v851 = vrcp.pop %v802
        %v852 = vmul.f32 1.0, %v851
        %v853 = vrcp.pop %v803
        %v854 = vmul.f32 1.0, %v853
        %v855 = vrcp.pop %v804
        %v856 = vmul.f32 1.0, %v855
        %v857 = vrcp.pop %v805
        %v858 = vmul.f32 1.0, %v857
        %v859 = vrcp.pop %v806
        %v860 = vmul.f32 1.0, %v859
        %v861 = vrcp.pop %v807
        %v862 = vmul.f32 1.0, %v861
        %v863 = vrcp.pop %v808
        %v864 = vmul.f32 1.0, %v863
        %v865 = vrcp.pop %v809
        %v866 = vmul.f32 1.0, %v865
        %v867 = vrcp.pop %v810
        %v868 = vmul.f32 1.0, %v867
        %v869 = vrcp.pop %v811
        %v870 = vmul.f32 1.0, %v869
        %v871 = vrcp.pop %v812
        %v872 = vmul.f32 1.0, %v871
        %v873 = vrcp.pop %v813
        %v874 = vmul.f32 1.0, %v873
        %v875 = vrcp.pop %v814
        %v876 = vmul.f32 1.0, %v875
        %v877 = vrcp.pop %v815
        %v878 = vmul.f32 1.0, %v877
        %v879 = vrcp.pop %v816
        %v880 = vmul.f32 1.0, %v879
        %v881 = vmul.f32 %v611, %v818
        %v882 = vmul.f32 %v613, %v820
        %v883 = vmul.f32 %v615, %v822
        %v884 = vmul.f32 %v617, %v824
        %v885 = vmul.f32 %v621, %v826
        %v886 = vmul.f32 %v623, %v828
        %v887 = vmul.f32 %v625, %v830
        %v888 = vmul.f32 %v627, %v832
        %v889 = vmul.f32 %v631, %v834
        %v890 = vmul.f32 %v633, %v836
        %v891 = vmul.f32 %v635, %v838
        %v892 = vmul.f32 %v637, %v840
        %v893 = vmul.f32 %v641, %v842
        %v894 = vmul.f32 %v643, %v844
        %v895 = vmul.f32 %v645, %v846
        %v896 = vmul.f32 %v647, %v848
        %v897 = vmul.f32 %v651, %v850
        %v898 = vmul.f32 %v653, %v852
        %v899 = vmul.f32 %v655, %v854
        %v900 = vmul.f32 %v657, %v856
        %v901 = vmul.f32 %v661, %v858
        %v902 = vmul.f32 %v663, %v860
        %v903 = vmul.f32 %v665, %v862
        %v904 = vmul.f32 %v667, %v864
        %v905 = vmul.f32 %v671, %v866
        %v906 = vmul.f32 %v673, %v868
        %v907 = vmul.f32 %v675, %v870
        %v908 = vmul.f32 %v677, %v872
        %v909 = vmul.f32 %v681, %v874
        %v910 = vmul.f32 %v683, %v876
        %v911 = vmul.f32 %v685, %v878
        %v912 = vmul.f32 %v687, %v880
        %v913 = vpack.c.bf16 %v883, %v881
        %v914 = vpack.c.bf16 %v884, %v882
        %v915 = vpack.c.bf16 %v887, %v885
        %v916 = vpack.c.bf16 %v888, %v886
        %v917 = vpack.c.bf16 %v891, %v889
        %v918 = vpack.c.bf16 %v892, %v890
        %v919 = vpack.c.bf16 %v895, %v893
        %v920 = vpack.c.bf16 %v896, %v894
        %v921 = vpack.c.bf16 %v899, %v897
        %v922 = vpack.c.bf16 %v900, %v898
        %v923 = vpack.c.bf16 %v903, %v901
        %v924 = vpack.c.bf16 %v904, %v902
        %v925 = vpack.c.bf16 %v907, %v905
        %v926 = vpack.c.bf16 %v908, %v906
        %v927 = vpack.c.bf16 %v911, %v909
        %v928 = vpack.c.bf16 %v912, %v910
        %v929 = vld [vmem:[#allocation7] sm:$0xf]
        %v930 = vld [vmem:[#allocation7 + $0x4] sm:$0xf]
        %v931 = vld [vmem:[#allocation7 + $0x8] sm:$0xf]
        %v932 = vld [vmem:[#allocation7 + $0xc] sm:$0xf]
        %v933 = vld [vmem:[#allocation7 + $0x10] sm:$0xf]
        %v934 = vld [vmem:[#allocation7 + $0x14] sm:$0xf]
        %v935 = vld [vmem:[#allocation7 + $0x18] sm:$0xf]
        %v936 = vld [vmem:[#allocation7 + $0x1c] sm:$0xf]
        %v937 = vld [vmem:[#allocation7 + $0x20] sm:$0xf]
        %v938 = vld [vmem:[#allocation7 + $0x24] sm:$0xf]
        %v939 = vld [vmem:[#allocation7 + $0x28] sm:$0xf]
        %v940 = vld [vmem:[#allocation7 + $0x2c] sm:$0xf]
        %v941 = vld [vmem:[#allocation7 + $0x30] sm:$0xf]
        %v942 = vld [vmem:[#allocation7 + $0x34] sm:$0xf]
        %v943 = vld [vmem:[#allocation7 + $0x38] sm:$0xf]
        %v944 = vld [vmem:[#allocation7 + $0x3c] sm:$0xf]
        %v945 = vld [vmem:[#allocation7 + $0x40] sm:$0xf]
        %v946 = vld [vmem:[#allocation7 + $0x44] sm:$0xf]
        %v947 = vld [vmem:[#allocation7 + $0x48] sm:$0xf]
        %v948 = vld [vmem:[#allocation7 + $0x4c] sm:$0xf]
        %v949 = vld [vmem:[#allocation7 + $0x50] sm:$0xf]
        %v950 = vld [vmem:[#allocation7 + $0x54] sm:$0xf]
        %v951 = vld [vmem:[#allocation7 + $0x58] sm:$0xf]
        %v952 = vld [vmem:[#allocation7 + $0x5c] sm:$0xf]
        %v953 = vld [vmem:[#allocation7 + $0x60] sm:$0xf]
        %v954 = vld [vmem:[#allocation7 + $0x64] sm:$0xf]
        %v955 = vld [vmem:[#allocation7 + $0x68] sm:$0xf]
        %v956 = vld [vmem:[#allocation7 + $0x6c] sm:$0xf]
        %v957 = vld [vmem:[#allocation7 + $0x70] sm:$0xf]
        %v958 = vld [vmem:[#allocation7 + $0x74] sm:$0xf]
        %v959 = vld [vmem:[#allocation7 + $0x78] sm:$0xf]
        %v960 = vld [vmem:[#allocation7 + $0x7c] sm:$0xf]
        %v961 = vld [vmem:[%s4] sm:$0x1]
        %v963 = vlaneseq
        %v964 = vshrl.u32 %v963, 7
        %v965 = vsub.s32 0, %v964
        %v966 = vrot.slane %v961, %v965
        %v1000 = vunpack.c.l.b16 %v929
        %v1001 = vunpack.c.l.b16 %v930
        %v1002 = vunpack.c.l.b16 %v931
        %v1003 = vunpack.c.l.b16 %v932
        %v1004 = vunpack.c.l.b16 %v933
        %v1005 = vunpack.c.l.b16 %v934
        %v1006 = vunpack.c.l.b16 %v935
        %v1007 = vunpack.c.l.b16 %v936
        %v1008 = vunpack.c.l.b16 %v937
        %v1009 = vunpack.c.l.b16 %v938
        %v1010 = vunpack.c.l.b16 %v939
        %v1011 = vunpack.c.l.b16 %v940
        %v1012 = vunpack.c.l.b16 %v941
        %v1013 = vunpack.c.l.b16 %v942
        %v1014 = vunpack.c.l.b16 %v943
        %v1015 = vunpack.c.l.b16 %v944
        %v1016 = vunpack.c.l.b16 %v945
        %v1017 = vunpack.c.l.b16 %v946
        %v1018 = vunpack.c.l.b16 %v947
        %v1019 = vunpack.c.l.b16 %v948
        %v1020 = vunpack.c.l.b16 %v949
        %v1021 = vunpack.c.l.b16 %v950
        %v1022 = vunpack.c.l.b16 %v951
        %v1023 = vunpack.c.l.b16 %v952
        %v1024 = vunpack.c.l.b16 %v953
        %v1025 = vunpack.c.l.b16 %v954
        %v1026 = vunpack.c.l.b16 %v955
        %v1027 = vunpack.c.l.b16 %v956
        %v1028 = vunpack.c.l.b16 %v957
        %v1029 = vunpack.c.l.b16 %v958
        %v1030 = vunpack.c.l.b16 %v959
        %v1031 = vunpack.c.l.b16 %v960
        %v1032 = vpack.c.b16 %v1001, %v1000
        %v1033 = vpack.c.b16 %v1003, %v1002
        %v1034 = vpack.c.b16 %v1005, %v1004
        %v1035 = vpack.c.b16 %v1007, %v1006
        %v1036 = vpack.c.b16 %v1009, %v1008
        %v1037 = vpack.c.b16 %v1011, %v1010
        %v1038 = vpack.c.b16 %v1013, %v1012
        %v1039 = vpack.c.b16 %v1015, %v1014
        %v1040 = vpack.c.b16 %v1017, %v1016
        %v1041 = vpack.c.b16 %v1019, %v1018
        %v1042 = vpack.c.b16 %v1021, %v1020
        %v1043 = vpack.c.b16 %v1023, %v1022
        %v1044 = vpack.c.b16 %v1025, %v1024
        %v1045 = vpack.c.b16 %v1027, %v1026
        %v1046 = vpack.c.b16 %v1029, %v1028
        %v1047 = vpack.c.b16 %v1031, %v1030
        %1064 = vmatprep.subr.bf16.mxu0 0
        %1065 = vmatpush1.bf16.msra.mxu0 %v1032
        %1066 = vmatprep.subr.bf16.mxu0 0
        %1067 = vmatpush1.bf16.msra.mxu0 %v1033
        %1068 = vmatprep.subr.bf16.mxu0 0
        %1069 = vmatpush1.bf16.msra.mxu0 %v1034
        %1070 = vmatprep.subr.bf16.mxu0 0
        %1071 = vmatpush1.bf16.msra.mxu0 %v1035
        %1072 = vmatprep.subr.bf16.mxu0 0
        %1073 = vmatpush1.bf16.msra.mxu0 %v1036
        %1074 = vmatprep.subr.bf16.mxu0 0
        %1075 = vmatpush1.bf16.msra.mxu0 %v1037
        %1076 = vmatprep.subr.bf16.mxu0 0
        %1077 = vmatpush1.bf16.msra.mxu0 %v1038
        %1078 = vmatprep.subr.bf16.mxu0 0
        %1079 = vmatpush1.bf16.msra.mxu0 %v1039
        %1080 = vmatprep.subr.bf16.mxu0 0
        %1081 = vmatpush1.bf16.msra.mxu0 %v1040
        %1082 = vmatprep.subr.bf16.mxu0 0
        %1083 = vmatpush1.bf16.msra.mxu0 %v1041
        %1084 = vmatprep.subr.bf16.mxu0 0
        %1085 = vmatpush1.bf16.msra.mxu0 %v1042
        %1086 = vmatprep.subr.bf16.mxu0 0
        %1087 = vmatpush1.bf16.msra.mxu0 %v1043
        %1088 = vmatprep.subr.bf16.mxu0 0
        %1089 = vmatpush1.bf16.msra.mxu0 %v1044
        %1090 = vmatprep.subr.bf16.mxu0 0
        %1091 = vmatpush1.bf16.msra.mxu0 %v1045
        %1092 = vmatprep.subr.bf16.mxu0 0
        %1093 = vmatpush1.bf16.msra.mxu0 %v1046
        %1094 = vmatprep.subr.bf16.mxu0 0
        %1095 = vmatpush1.bf16.msra.mxu0 %v1047
        %1096 = vmatprep.mubr.bf16.mxu0 %v914
        %1097 = vmatmul.mubr.bf16.gmra.mrb[0].mxu0 %v913
        %v1098 = vpop.f32.mrb[0].mxu0
        %v1099 = vadd.f32 %v966, %v1098
        %v1100 = vpop.f32.mrb[0].mxu0
        %v1101 = vpop.f32.mrb[0].mxu0
        %v1102 = vadd.f32 %v966, %v1101
        %v1103 = vpop.f32.mrb[0].mxu0
        %1104 = vmatprep.mubr.bf16.mxu0 %v916
        %1105 = vmatmul.mubr.bf16.gmra.mrb[0].mxu0 %v915
        %v1106 = vpop.f32.mrb[0].mxu0
        %v1107 = vadd.f32 %v966, %v1106
        %v1108 = vpop.f32.mrb[0].mxu0
        %v1109 = vpop.f32.mrb[0].mxu0
        %v1110 = vadd.f32 %v966, %v1109
        %v1111 = vpop.f32.mrb[0].mxu0
        %1112 = vmatprep.mubr.bf16.mxu0 %v918
        %1113 = vmatmul.mubr.bf16.gmra.mrb[0].mxu0 %v917
        %v1114 = vpop.f32.mrb[0].mxu0
        %v1115 = vadd.f32 %v966, %v1114
        %v1116 = vpop.f32.mrb[0].mxu0
        %v1117 = vpop.f32.mrb[0].mxu0
        %v1118 = vadd.f32 %v966, %v1117
        %v1119 = vpop.f32.mrb[0].mxu0
        %1120 = vmatprep.mubr.bf16.mxu0 %v920
        %1121 = vmatmul.mubr.bf16.gmra.mrb[0].mxu0 %v919
        %v1122 = vpop.f32.mrb[0].mxu0
        %v1123 = vadd.f32 %v966, %v1122
        %v1124 = vpop.f32.mrb[0].mxu0
        %v1125 = vpop.f32.mrb[0].mxu0
        %v1126 = vadd.f32 %v966, %v1125
        %v1127 = vpop.f32.mrb[0].mxu0
        %1128 = vmatprep.mubr.bf16.mxu0 %v922
        %1129 = vmatmul.mubr.bf16.gmra.mrb[0].mxu0 %v921
        %v1130 = vpop.f32.mrb[0].mxu0
        %v1131 = vadd.f32 %v966, %v1130
        %v1132 = vpop.f32.mrb[0].mxu0
        %v1133 = vpop.f32.mrb[0].mxu0
        %v1134 = vadd.f32 %v966, %v1133
        %v1135 = vpop.f32.mrb[0].mxu0
        %1136 = vmatprep.mubr.bf16.mxu0 %v924
        %1137 = vmatmul.mubr.bf16.gmra.mrb[0].mxu0 %v923
        %v1138 = vpop.f32.mrb[0].mxu0
        %v1139 = vadd.f32 %v966, %v1138
        %v1140 = vpop.f32.mrb[0].mxu0
        %v1141 = vpop.f32.mrb[0].mxu0
        %v1142 = vadd.f32 %v966, %v1141
        %v1143 = vpop.f32.mrb[0].mxu0
        %1144 = vmatprep.mubr.bf16.mxu0 %v926
        %1145 = vmatmul.mubr.bf16.gmra.mrb[0].mxu0 %v925
        %v1146 = vpop.f32.mrb[0].mxu0
        %v1147 = vadd.f32 %v966, %v1146
        %v1148 = vpop.f32.mrb[0].mxu0
        %v1149 = vpop.f32.mrb[0].mxu0
        %v1150 = vadd.f32 %v966, %v1149
        %v1151 = vpop.f32.mrb[0].mxu0
        %1152 = vmatprep.mubr.bf16.mxu0 %v928
        %1153 = vmatmul.mubr.bf16.gmra.mrb[0].mxu0 %v927
        %v1154 = vpop.f32.mrb[0].mxu0
        %v1155 = vadd.f32 %v966, %v1154
        %v1156 = vpop.f32.mrb[0].mxu0
        %v1157 = vpop.f32.mrb[0].mxu0
        %v1158 = vadd.f32 %v966, %v1157
        %v1159 = vpop.f32.mrb[0].mxu0
        %1160 = vdwg.mxu0
        %1161 = vst [vmem:[%s272] sm:$0xff] %v1099
        %1162 = vst [vmem:[%s272 + $0x8] sm:$0xff] %v1102
        %1163 = vst [vmem:[%s272 + $0x10] sm:$0xff] %v1107
        %1164 = vst [vmem:[%s272 + $0x18] sm:$0xff] %v1110
        %1165 = vst [vmem:[%s272 + $0x20] sm:$0xff] %v1115
        %1166 = vst [vmem:[%s272 + $0x28] sm:$0xff] %v1118
        %1167 = vst [vmem:[%s272 + $0x30] sm:$0xff] %v1123
        %1168 = vst [vmem:[%s272 + $0x38] sm:$0xff] %v1126
        %1169 = vst [vmem:[%s272 + $0x40] sm:$0xff] %v1131
        %1170 = vst [vmem:[%s272 + $0x48] sm:$0xff] %v1134
        %1171 = vst [vmem:[%s272 + $0x50] sm:$0xff] %v1139
        %1172 = vst [vmem:[%s272 + $0x58] sm:$0xff] %v1142
        %1173 = vst [vmem:[%s272 + $0x60] sm:$0xff] %v1147
        %1174 = vst [vmem:[%s272 + $0x68] sm:$0xff] %v1150
        %1175 = vst [vmem:[%s272 + $0x70] sm:$0xff] %v1155
        %1176 = vst [vmem:[%s272 + $0x78] sm:$0xff] %v1158
        %s1177 = sand.u32 %s141, 1
        %s1178 = scalar_lea.sflag [#allocation4], %s1177
        %s1179 = sand.u32 %s141, 1
        %s1180 = smul.addr %s1179, 128
        %s1181 = scalar_lea.vmem [#allocation8], %s1180
        // Predicated region
        $region53: #{tpu_custom_call.1} parent=39 // pred_check
          %p1182 = pneg %p151
        $region54: #{tpu_custom_call.1} parent=39 // pred_check_branch
          %1184 = sbr.rel (%p1182) target = $region56
        $region55: #{tpu_custom_call.1} parent=39 // pred_region
          %s1185 = smul.u32 16, %s23
          %s1187 = ssub.s32 2048, 2048
          %1188 = vsyncadd %s1178, %s1187
          %s1189 = smul.addr %s1185, 128
          %s1190 = scalar_lea.hbm %s5, %s1189
          %s1191 = sshll.u32 %s1181, 4
          %s1192 = int_to_ptr.vmem [resolvable:$true] %s1191
          %1197 = dma.vmem_to_hbm [thread:$0]  %s1192, 2048, %s1190, %s1178, 128, 128, 8
        $region56: #{tpu_custom_call.1} parent=39 // pred_fallthru
          _
      $region40: #{tpu_custom_call.1} parent=5 // pred_fallthru
        _
      %p1198 = scmp.le.s32.totalorder 2, %s18
      // Predicated region
      $region57: #{tpu_custom_call.1} parent=5 // pred_check
        %p1199 = pneg %p1198
      $region58: #{tpu_custom_call.1} parent=5 // pred_check_branch
        %1201 = sbr.rel (%p1199) target = $region60
      $region59: #{tpu_custom_call.1} parent=5 // pred_region
        %s1202 = ssub.s32 %s18, 2
        // Predicated region
        $region61: #{tpu_custom_call.1} parent=59 // pred_check
          %p1203 = pneg %p157
        $region62: #{tpu_custom_call.1} parent=59 // pred_check_branch
          %1205 = sbr.rel (%p1203) target = $region64
        $region63: #{tpu_custom_call.1} parent=59 // pred_region
          %s1206 = sand.u32 %s142, 1
          %s1207 = scalar_lea.sflag [#allocation4], %s1206
          %s1208 = sand.u32 %s142, 1
          %s1209 = smul.addr %s1208, 128
          %s1210 = scalar_lea.vmem [#allocation8], %s1209
          %1211 = dma.done %s1207, 2048
        $region64: #{tpu_custom_call.1} parent=59 // pred_fallthru
          _
      $region60: #{tpu_custom_call.1} parent=5 // pred_fallthru
        _
    $region6: #{tpu_custom_call.1} parent=1 // loop_footer
      %s22 = sadd.s32 1, %s18
    $region7: #{tpu_custom_call.1} parent=1 // loop_footer_branch
      %17 = sbr.rel target = $region3
    $region8: #{tpu_custom_call.1} parent=1 // loop_exit
      _
    %1212 = vsyncpa [#allocation3], 1
    %s1213 = scalar_lea.sflag [#allocation3], 1
    %1214 = vsyncpa %s1213, 1
    %1215 = vsyncpa [#allocation6], 1
    %1216 = vsyncpa [#allocation4], 1
    %s1217 = scalar_lea.sflag [#allocation4], 1
    %1218 = vsyncpa %s1217, 1

</llo_original>
